<compile_context>
chip_gen: v5e
topology: v5e:2x2
jax: 0.10.0
libtpu: 0.0.40
codegen_flags: <defaults>
</compile_context>

<pallas_src>
import functools

import jax
import jax.numpy as jnp
from jax.experimental import pallas as pl
from jax.experimental.pallas import tpu as pltpu


def _round_up(x, m):
    return (x + m - 1) // m * m


def _clip_kernel(x_ref, w_ref, txt_ref, out_ref, acc_ref, *, num_classes):
    # Grid = (batch_tiles, k_tiles); K (reduction over D_in) is innermost.
    #   x_ref    : VMEM (tb, tk)     bf16  flattened-image tile
    #   w_ref    : VMEM (tk, E)      bf16  synthetic image-encoder weight tile
    #   txt_ref  : VMEM (E, C_pad)   bf16  logit_scale * text_features, transposed
    #   out_ref  : VMEM (1, C_pad)   f32   mean-over-batch softmax probability
    #   acc_ref  : VMEM (tb, E)      f32   embedding accumulator over K tiles
    k = pl.program_id(1)

    @pl.when(k == 0)
    def _():
        acc_ref[...] = jnp.zeros_like(acc_ref)

    # encode_image: streamed bf16 matmul on the MXU with f32 accumulation.
    acc_ref[...] += jnp.dot(x_ref[...], w_ref[...],
                            preferred_element_type=jnp.float32)

    @pl.when(k == pl.num_programs(1) - 1)
    def _():
        feats = acc_ref[...]                                          # (tb, E)
        # normalize=True -> L2 normalize along the embedding dim.
        inv_norm = jax.lax.rsqrt(
            jnp.sum(feats * feats, axis=-1, keepdims=True) + 1e-12)
        feats = feats * inv_norm

        # logits = logit_scale * feats @ text^T  (scale folded into txt_ref,
        # transpose done once in the wrapper); bf16 MXU path, f32 accumulate.
        logits = jnp.dot(feats.astype(jnp.bfloat16), txt_ref[...],
                         preferred_element_type=jnp.float32)           # (tb, C_pad)

        c_pad = logits.shape[-1]
        if num_classes < c_pad:
            # Mask padded class lanes in-kernel (no extra input DMA).
            col = jax.lax.broadcasted_iota(jnp.int32, (1, c_pad), 1)
            logits = logits + jnp.where(col < num_classes,
                                        0.0, -1e30).astype(jnp.float32)

        # Numerically stable softmax over classes; reciprocal runs on the EUP.
        m = jnp.max(logits, axis=-1, keepdims=True)
        e = jnp.exp(logits - m)
        probs = e * pl.reciprocal(jnp.sum(e, axis=-1, keepdims=True),
                                  approx=True)

        # marginal probability = mean over the batch rows of this tile.
        out_ref[...] = jnp.mean(probs, axis=0, keepdims=True)         # (1, C_pad)


def open_clip_forward(x_nchw, enc_w, text_features, logit_scale, *, tk=7168):
    """OpenClip.forward: returns (pred_class int array, marginal_prob (C,))."""
    B = x_nchw.shape[0]
    d_in = x_nchw.shape[1] * x_nchw.shape[2] * x_nchw.shape[3]
    embed = enc_w.shape[1]
    num_classes = text_features.shape[0]
    c_pad = _round_up(num_classes, 128)          # lane-dense class axis

    # K-tile sizing: multiples of 128, capped by (padded) D_in.  Any remainder
    # along K is handled by zero-padding x / enc_w below (never a tk=d_in
    # fallback, which would blow VMEM at real CLIP sizes).
    tk = max(128, min(_round_up(tk, 128), _round_up(d_in, 128)))
    d_pad = _round_up(d_in, tk)
    k_tiles = d_pad // tk
    tb = B                                       # tiny batch: one batch tile
    b_tiles = 1                                  # enc_w streamed exactly once

    # Constant-per-call prep done once in the wrapper (not in the hot loop):
    x_flat = x_nchw.reshape(B, d_in).astype(jnp.bfloat16)        # NCHW flatten
    w_bf16 = enc_w.astype(jnp.bfloat16)                          # bf16 weights
    if d_pad != d_in:
        x_flat = jnp.pad(x_flat, ((0, 0), (0, d_pad - d_in)))
        w_bf16 = jnp.pad(w_bf16, ((0, d_pad - d_in), (0, 0)))
    # Fold logit_scale into the (pre-normalized) text matrix, pre-transpose to
    # (E, C_pad) and store bf16 so the kernel never transposes or rescales.
    txt_t = (jnp.float32(logit_scale) * text_features.astype(jnp.float32)).T
    txt_t = jnp.pad(txt_t, ((0, 0), (0, c_pad - num_classes))).astype(jnp.bfloat16)

    # Scoped-VMEM budget: double-buffered streams + resident text + accumulator,
    # with 2x headroom, floored at 32 MiB and capped at 48 MiB (v7x has only
    # 64 MiB per TensorCore; v5e/v6e have 128 MiB physical).
    vmem_need = (2 * tk * embed * 2          # enc_w double-buffer (bf16)
                 + 2 * tb * tk * 2           # x double-buffer (bf16)
                 + 2 * embed * c_pad * 2     # txt double-buffer (bf16)
                 + 2 * 1 * c_pad * 4         # out double-buffer (f32)
                 + tb * embed * 4)           # acc scratch (f32)
    vmem_limit = int(min(max(2 * vmem_need, 32 * 1024 * 1024),
                         48 * 1024 * 1024))

    grid_spec = pltpu.PrefetchScalarGridSpec(
        num_scalar_prefetch=0,
        grid=(b_tiles, k_tiles),
        in_specs=[
            pl.BlockSpec((tb, tk), lambda b, k: (b, k)),         # x     (stream K)
            pl.BlockSpec((tk, embed), lambda b, k: (k, 0)),      # enc_w (stream K)
            pl.BlockSpec((embed, c_pad), lambda b, k: (0, 0)),   # text  (resident)
        ],
        out_specs=pl.BlockSpec((1, c_pad), lambda b, k: (b, 0)),
        scratch_shapes=[pltpu.VMEM((tb, embed), jnp.float32)],
    )

    cost = pl.CostEstimate(
        flops=2 * B * d_pad * embed + 2 * B * embed * c_pad,
        transcendentals=B * c_pad,
        bytes_accessed=(d_pad * embed * 2 + B * d_pad * 2
                        + embed * c_pad * 2 + b_tiles * c_pad * 4),
    )

    marginal_padded = pl.pallas_call(
        functools.partial(_clip_kernel, num_classes=num_classes),
        out_shape=jax.ShapeDtypeStruct((b_tiles, c_pad), jnp.float32),
        grid_spec=grid_spec,
        compiler_params=pltpu.CompilerParams(
            dimension_semantics=("parallel", "arbitrary"),
            vmem_limit_bytes=vmem_limit,
        ),
        cost_estimate=cost,
    )(x_flat, w_bf16, txt_t)

    marginal = marginal_padded[0, :num_classes]   # drop lane padding
    marginal = marginal / jnp.sum(marginal)  # exact renorm (approx recip in-kernel)
    pred_class = jnp.argmax(marginal)        # like .argmax().item() (glue)
    return pred_class, marginal


if __name__ == "__main__":
    key = jax.random.PRNGKey(0)
    kx, kw, kt = jax.random.split(key, 3)

    # Small shapes consistent with the module's forward (NCHW images).
    B, C, H, W = 2, 4, 16, 16
    EMBED = 128                    # CLIP-style embedding dim (lane-aligned)
    NUM_CLASSES = 16               # number of class prompts
    D_IN = C * H * W               # 1024

    # Deterministic synthetic parameters (module __init__ equivalents).
    x = jax.random.normal(kx, (B, C, H, W), dtype=jnp.float32)
    enc_w = (jax.random.normal(kw, (D_IN, EMBED), dtype=jnp.float32)
             * (1.0 / D_IN ** 0.5)).astype(jnp.bfloat16)   # bf16 weights in HBM

    # text_features: encode_text(..., normalize=True) -> pre-normalized rows.
    txt_raw = jax.random.normal(kt, (NUM_CLASSES, EMBED), dtype=jnp.float32)
    text_features = txt_raw / jnp.linalg.norm(txt_raw, axis=-1, keepdims=True)

    # logit_scale = model.logit_scale.exp(); CLIP init is ln(1/0.07).
    logit_scale = float(jnp.exp(jnp.asarray(jnp.log(1.0 / 0.07), jnp.float32)))

    # tk=256 here only to exercise the multi-step K accumulation path at toy
    # shapes; the production default (tk=7168) targets real CLIP D_in=150528.
    pred_class, marginal = open_clip_forward(x, enc_w, text_features,
                                             logit_scale, tk=256)
    pred_class = jax.block_until_ready(pred_class)
    marginal = jax.block_until_ready(marginal)

    # Pure-JAX reference with the same bf16 quantization of inputs (f32 math).
    x_flat32 = x.reshape(B, D_IN).astype(jnp.bfloat16).astype(jnp.float32)
    w32 = enc_w.astype(jnp.float32)
    feats_ref = x_flat32 @ w32
    feats_ref = feats_ref / jnp.linalg.norm(feats_ref, axis=-1, keepdims=True)
    feats_b = feats_ref.astype(jnp.bfloat16).astype(jnp.float32)
    txt_b = (logit_scale * text_features).astype(jnp.bfloat16).astype(jnp.float32)
    logits_ref = feats_b @ txt_b.T
    probs_ref = jax.nn.softmax(logits_ref, axis=1).mean(axis=0)
    pred_ref = int(jnp.argmax(probs_ref))

    # Sanity: marginal sums to 1, matches the reference, and argmax agrees.
    assert abs(float(jnp.sum(marginal)) - 1.0) < 1e-4
    assert bool(jnp.allclose(marginal, probs_ref, atol=5e-3))
    assert 0 <= int(pred_class) < NUM_CLASSES
    assert int(pred_class) == pred_ref

    print("KERNEL_OK")
</pallas_src>

<mosaic_0001>
module attributes {stable_mosaic.version = 11 : i64} {
  func.func @_clip_kernel(%arg0: i32, %arg1: i32, %arg2: memref<2x256xbf16, #tpu.memory_space<vmem>>, %arg3: memref<256x128xbf16, #tpu.memory_space<vmem>>, %arg4: memref<128x128xbf16, #tpu.memory_space<vmem>>, %arg5: memref<1x128xf32, #tpu.memory_space<vmem>>, %arg6: memref<2x128xf32, #tpu.memory_space<vmem>>) attributes {dimension_semantics = [#tpu.dimension_semantics<parallel>, #tpu.dimension_semantics<arbitrary>], iteration_bounds = array<i64: 1, 4>, scalar_prefetch = 0 : i64, scratch_operands = 1 : i64, tpu.core_type = #tpu.core_type<tc>, window_params = [{transform_indices = @transform_0, window_bounds = array<i64: 2, 256>}, {transform_indices = @transform_1, window_bounds = array<i64: 256, 128>}, {pipeline_mode = #tpu.pipeline_mode<synchronous>, transform_indices = @transform_2, window_bounds = array<i64: 128, 128>}, {transform_indices = @transform_3, window_bounds = array<i64: 1, 128>}]} {
    %c0_i32 = arith.constant 0 : i32
    %0 = arith.cmpi eq, %arg1, %c0_i32 : i32
    %1 = arith.extui %0 : i1 to i32
    %c0_i32_0 = arith.constant 0 : i32
    %2 = arith.cmpi ne, %1, %c0_i32_0 : i32
    scf.if %2 {
      %cst_9 = arith.constant 0.000000e+00 : f32
      %12 = vector.broadcast %cst_9 : f32 to vector<2x128xf32>
      %c0_10 = arith.constant 0 : index
      %c0_11 = arith.constant 0 : index
      %13 = vector.load %arg6[%c0_10, %c0_11] : memref<2x128xf32, #tpu.memory_space<vmem>>, vector<2x128xf32>
      tpu.vector_store %arg6[%c0_10, %c0_11], %12 {strides = array<i32>} : memref<2x128xf32, #tpu.memory_space<vmem>>, vector<2x128xf32>,
    } else {
    }
    %c0 = arith.constant 0 : index
    %c0_1 = arith.constant 0 : index
    %3 = vector.load %arg6[%c0, %c0_1] : memref<2x128xf32, #tpu.memory_space<vmem>>, vector<2x128xf32>
    %c0_2 = arith.constant 0 : index
    %c0_3 = arith.constant 0 : index
    %4 = vector.load %arg2[%c0_2, %c0_3] : memref<2x256xbf16, #tpu.memory_space<vmem>>, vector<2x256xbf16>
    %c0_4 = arith.constant 0 : index
    %c0_5 = arith.constant 0 : index
    %5 = vector.load %arg3[%c0_4, %c0_5] : memref<256x128xbf16, #tpu.memory_space<vmem>>, vector<256x128xbf16>
    %cst = arith.constant dense<0.000000e+00> : vector<2x128xf32>
    %6 = tpu.matmul %4, %5, %cst {dimension_numbers = #tpu.dot_dimension_numbers<[1], [0], [0], [1], [0, 0, 1, 1], [], []>} : vector<2x256xbf16>, vector<256x128xbf16>, vector<2x128xf32> -> vector<2x128xf32>
    %7 = arith.addf %3, %6 : vector<2x128xf32>
    %c0_6 = arith.constant 0 : index
    %c0_7 = arith.constant 0 : index
    %8 = vector.load %arg6[%c0_6, %c0_7] : memref<2x128xf32, #tpu.memory_space<vmem>>, vector<2x128xf32>
    tpu.vector_store %arg6[%c0_6, %c0_7], %7 {strides = array<i32>} : memref<2x128xf32, #tpu.memory_space<vmem>>, vector<2x128xf32>,
    %c3_i32 = arith.constant 3 : i32
    %9 = arith.cmpi eq, %arg1, %c3_i32 : i32
    %10 = arith.extui %9 : i1 to i32
    %c0_i32_8 = arith.constant 0 : i32
    %11 = arith.cmpi ne, %10, %c0_i32_8 : i32
    scf.if %11 {
      %c0_9 = arith.constant 0 : index
      %c0_10 = arith.constant 0 : index
      %12 = vector.load %arg6[%c0_9, %c0_10] : memref<2x128xf32, #tpu.memory_space<vmem>>, vector<2x128xf32>
      %13 = arith.mulf %12, %12 : vector<2x128xf32>
      %cst_11 = arith.constant dense<0.000000e+00> : vector<2xf32>
      %14 = vector.multi_reduction <add>, %13, %cst_11 [1] : vector<2x128xf32> to vector<2xf32>
      %15 = vector.shape_cast %14 : vector<2xf32> to vector<2x1xf32>
      %cst_12 = arith.constant 9.99999996E-13 : f32
      %16 = vector.broadcast %cst_12 : f32 to vector<2x1xf32>
      %17 = arith.addf %15, %16 : vector<2x1xf32>
      %18 = math.rsqrt %17 : vector<2x1xf32>
      %19 = vector.broadcast %18 : vector<2x1xf32> to vector<2x128xf32>
      %20 = arith.mulf %12, %19 : vector<2x128xf32>
      %21 = arith.truncf %20 : vector<2x128xf32> to vector<2x128xbf16>
      %c0_13 = arith.constant 0 : index
      %c0_14 = arith.constant 0 : index
      %22 = vector.load %arg4[%c0_13, %c0_14] : memref<128x128xbf16, #tpu.memory_space<vmem>>, vector<128x128xbf16>
      %cst_15 = arith.constant dense<0.000000e+00> : vector<2x128xf32>
      %23 = tpu.matmul %21, %22, %cst_15 {dimension_numbers = #tpu.dot_dimension_numbers<[1], [0], [0], [1], [0, 0, 1, 1], [], []>} : vector<2x128xbf16>, vector<128x128xbf16>, vector<2x128xf32> -> vector<2x128xf32>
      %24 = tpu.iota {dimensions = array<i32: 1>} : vector<1x128xi32>
      %c16_i32 = arith.constant 16 : i32
      %25 = vector.broadcast %c16_i32 : i32 to vector<1x128xi32>
      %26 = arith.cmpi slt, %24, %25 : vector<1x128xi32>
      %cst_16 = arith.constant 0.000000e+00 : f32
      %cst_17 = arith.constant -1.000000e+30 : f32
      %27 = vector.broadcast %cst_16 : f32 to vector<1x128xf32>
      %28 = vector.broadcast %cst_17 : f32 to vector<1x128xf32>
      %29 = arith.select %26, %27, %28 : vector<1x128xi1>, vector<1x128xf32>
      %30 = vector.broadcast %29 : vector<1x128xf32> to vector<2x128xf32>
      %31 = arith.addf %23, %30 : vector<2x128xf32>
      %cst_18 = arith.constant dense<0xFF800000> : vector<2xf32>
      %32 = vector.multi_reduction <maximumf>, %31, %cst_18 [1] : vector<2x128xf32> to vector<2xf32>
      %33 = vector.shape_cast %32 : vector<2xf32> to vector<2x1xf32>
      %34 = vector.broadcast %33 : vector<2x1xf32> to vector<2x128xf32>
      %35 = arith.subf %31, %34 : vector<2x128xf32>
      %36 = math.exp %35 : vector<2x128xf32>
      %cst_19 = arith.constant dense<0.000000e+00> : vector<2xf32>
      %37 = vector.multi_reduction <add>, %36, %cst_19 [1] : vector<2x128xf32> to vector<2xf32>
      %38 = vector.shape_cast %37 : vector<2xf32> to vector<2x1xf32>
      %39 = tpu.reciprocal %38 {approx = true} : vector<2x1xf32> -> vector<2x1xf32>
      %40 = vector.broadcast %39 : vector<2x1xf32> to vector<2x128xf32>
      %41 = arith.mulf %36, %40 : vector<2x128xf32>
      %cst_20 = arith.constant dense<0.000000e+00> : vector<128xf32>
      %42 = vector.multi_reduction <add>, %41, %cst_20 [0] : vector<2x128xf32> to vector<128xf32>
      %43 = vector.shape_cast %42 : vector<128xf32> to vector<1x128xf32>
      %cst_21 = arith.constant 2.000000e+00 : f32
      %44 = vector.broadcast %cst_21 : f32 to vector<1x128xf32>
      %45 = arith.divf %43, %44 : vector<1x128xf32>
      %c0_22 = arith.constant 0 : index
      %c0_23 = arith.constant 0 : index
      %46 = vector.load %arg5[%c0_22, %c0_23] : memref<1x128xf32, #tpu.memory_space<vmem>>, vector<1x128xf32>
      tpu.vector_store %arg5[%c0_22, %c0_23], %45 {strides = array<i32>} : memref<1x128xf32, #tpu.memory_space<vmem>>, vector<1x128xf32>,
    } else {
    }
    return
  }
  func.func @transform_0(%arg0: i32, %arg1: i32) -> (i32, i32) {
    %c0_i32 = arith.constant 0 : i32
    return %arg0, %arg1 : i32, i32
  }
  func.func @transform_1(%arg0: i32, %arg1: i32) -> (i32, i32) {
    %c0_i32 = arith.constant 0 : i32
    %c0_i32_0 = arith.constant 0 : i32
    return %arg1, %c0_i32 : i32, i32
  }
  func.func @transform_2(%arg0: i32, %arg1: i32) -> (i32, i32) {
    %c0_i32 = arith.constant 0 : i32
    %c0_i32_0 = arith.constant 0 : i32
    %c0_i32_1 = arith.constant 0 : i32
    return %c0_i32, %c0_i32_0 : i32, i32
  }
  func.func @transform_3(%arg0: i32, %arg1: i32) -> (i32, i32) {
    %c0_i32 = arith.constant 0 : i32
    %c0_i32_0 = arith.constant 0 : i32
    return %arg0, %c0_i32 : i32, i32
  }
}

</mosaic_0001>

<llo_original>
// kernel: tpu_custom_call.1
$region0: #{tpu_custom_call.1}
  #allocation0 [shape = 'u32[]', space=smem, size = 0x4, offset = 0x4, fixed_abs, tag = 'smem constant byte address 0x4 - core index']
  #allocation1 [shape = 'u32[72,128]{1,0:T(1,128)}', space=vmem, size = 0x9000, scoped, tag = 'internal scratch']
  #allocation2 [shape = 'f32[2,128]{1,0:T(2,128)}', space=vmem, size = 0x400, scoped, tag = 'scratch operand']
  %s0 = inlined_call_operand.hbm [shape: bf16[2,1024], index: 0, kind: input, shape index: {}]
  %s1 = inlined_call_operand.hbm [shape: bf16[1024,128], index: 1, kind: input, shape index: {}]
  %s2 = inlined_call_operand.hbm [shape: bf16[128,128], index: 2, kind: input, shape index: {}]
  %s3 = inlined_call_operand.hbm [shape: f32[1,128], index: 3, kind: output, shape index: {}]
  %s4 = sld [smem:[#allocation0]]
  $region65: #{tpu_custom_call.1} parent=0
    _
  %s6 = ssub.s32 1, %s4
  %s7 = scalar_select 0, %s6, %s4
  $region1: #{tpu_custom_call.1} parent=0
    #allocation3 [shape = 'u8[2048]{0}', space=vmem, size = 0x800, scoped, tag = 'input window, operand 0']
    #allocation4 [shape = 's32[2]{0}', space=sflag, size = 0x8, scoped, tag = 'scoped memory for tpu_custom_call.1']
    #allocation5 [shape = 's32[2]{0}', space=sflag, size = 0x8, scoped, tag = 'scoped memory for tpu_custom_call.1']
    #allocation6 [shape = 'u8[131072]{0}', space=vmem, size = 0x20000, scoped, tag = 'input window, operand 1']
    #allocation7 [shape = 's32[2]{0}', space=sflag, size = 0x8, scoped, tag = 'scoped memory for tpu_custom_call.1']
    #allocation8 [shape = 'u8[32768]{0}', space=vmem, size = 0x8000, scoped, tag = 'input window, operand 2, single buffered']
    #allocation9 [shape = 'u8[512]{0}', space=vmem, size = 0x400, scoped, tag = 'output window, operand 0, single buffered']
    %8 = vsyncpa [#allocation4], 0
    %s9 = scalar_lea.sflag [#allocation4], 1
    %10 = vsyncpa %s9, 0
    %11 = vsyncpa [#allocation7], 0
    %s12 = scalar_lea.sflag [#allocation7], 1
    %13 = vsyncpa %s12, 0
    %14 = vsyncpa [#allocation5], 0
    loop: start=0, step=1, limit=6
    $region2: #{tpu_custom_call.1} parent=1 // loop_pre_header
      _
    $region3: #{tpu_custom_call.1} parent=1 // loop_header
      %s16 = sphi 0, %s20
      %p17 = scmp.ge.s32.totalorder %s16, 6
      %s23 = sphi 0, %s35
      %s24 = sphi 0, %s31
      %s25 = sphi 0, %s23
      %s26 = sphi 0, %s24
      %s27 = sphi 0, %s25
      %s28 = sphi 0, %s26
      %s40 = sphi 0, %s42
      %s43 = sphi 0, %s40
      %s44 = sphi 0, %s43
      %s60 = sphi 0, %s44
      %s66 = sphi 0, %s68
      %s69 = sphi 0, %s66
      %s70 = sphi 0, %s69
      %s86 = sphi 0, %s70
      %s90 = sphi 0, %s90
      %s92 = sphi 0, %s90
      %s93 = sphi 0, %s92
      %s107 = sphi 0, %s93
      %s113 = sphi 0, %s115
      %s116 = sphi 0, %s113
      %s117 = sphi 0, %s116
      %s133 = sphi 0, %s117
    $region4: #{tpu_custom_call.1} parent=1 // loop_header_branch
      %19 = sbr.rel (%p17) target = $region8
    $region5: #{tpu_custom_call.1} parent=1 // loop_body
      %s21 = ssub.s32 %s16, 1
      %s22 = ssub.s32 %s16, 2
      %s29 = sadd.s32 1, %s24
      %p30 = scmp.ge.s32.totalorder %s29, 4
      %s31 = scalar_select %p30, 0, %s29
      %s32 = sadd.s32 1, %s23
      %s33 = scalar_select %p30, %s32, %s23
      %p34 = scmp.ge.s32.totalorder %s33, 1
      %s35 = scalar_select %p34, 0, %s33
      %s36 = ssub.s32 %s23, %s35
      %s37 = ssub.s32 %s24, %s31
      %s38 = sor.u32 %s36, %s37
      %p39 = scmp.eq.s32.totalorder %s38, 0
      %s41 = sadd.s32 %s40, 1
      %s42 = scalar_select %p39, %s40, %s41
      %p45 = pneg %p39
      %p46 = scmp.eq.s32.totalorder %s16, 3
      %p47 = por %p45, %p46
      %p48 = scmp.ne.s32.totalorder %s40, %s43
      %p49 = scmp.eq.s32.totalorder %s16, 0
      %p50 = por %p48, %p49
      %p51 = scmp.ne.s32.totalorder %s40, %s43
      %p52 = scmp.eq.s32.totalorder %s21, 3
      %p53 = por %p51, %p52
      %p54 = scmp.ne.s32.totalorder %s43, %s44
      %p55 = scmp.eq.s32.totalorder %s21, 0
      %p56 = por %p54, %p55
      %p57 = scmp.ne.s32.totalorder %s43, %s44
      %p58 = scmp.eq.s32.totalorder %s22, 3
      %p59 = por %p57, %p58
      %p61 = scmp.ne.s32.totalorder %s44, %s60
      %p62 = scmp.eq.s32.totalorder %s22, 0
      %p63 = por %p61, %p62
      %s64 = ssub.s32 %s24, %s31
      %p65 = scmp.eq.s32.totalorder %s64, 0
      %s67 = sadd.s32 %s66, 1
      %s68 = scalar_select %p65, %s66, %s67
      %p71 = pneg %p65
      %p72 = scmp.eq.s32.totalorder %s16, 3
      %p73 = por %p71, %p72
      %p74 = scmp.ne.s32.totalorder %s66, %s69
      %p75 = scmp.eq.s32.totalorder %s16, 0
      %p76 = por %p74, %p75
      %p77 = scmp.ne.s32.totalorder %s66, %s69
      %p78 = scmp.eq.s32.totalorder %s21, 3
      %p79 = por %p77, %p78
      %p80 = scmp.ne.s32.totalorder %s69, %s70
      %p81 = scmp.eq.s32.totalorder %s21, 0
      %p82 = por %p80, %p81
      %p83 = scmp.ne.s32.totalorder %s69, %s70
      %p84 = scmp.eq.s32.totalorder %s22, 3
      %p85 = por %p83, %p84
      %p87 = scmp.ne.s32.totalorder %s70, %s86
      %p88 = scmp.eq.s32.totalorder %s22, 0
      %p89 = por %p87, %p88
      %s91 = sadd.s32 %s90, 1
      %p94 = scmp.eq.s32.totalorder %s16, 3
      %p95 = scmp.ne.s32.totalorder %s90, %s92
      %p96 = scmp.eq.s32.totalorder %s16, 0
      %p97 = por %p95, %p96
      %p98 = scmp.ne.s32.totalorder %s90, %s92
      %p99 = scmp.eq.s32.totalorder %s21, 3
      %p100 = por %p98, %p99
      %p101 = scmp.ne.s32.totalorder %s92, %s93
      %p102 = scmp.eq.s32.totalorder %s21, 0
      %p103 = por %p101, %p102
      %p104 = scmp.ne.s32.totalorder %s92, %s93
      %p105 = scmp.eq.s32.totalorder %s22, 3
      %p106 = por %p104, %p105
      %p108 = scmp.ne.s32.totalorder %s93, %s107
      %p109 = scmp.eq.s32.totalorder %s22, 0
      %p110 = por %p108, %p109
      %s111 = ssub.s32 %s23, %s35
      %p112 = scmp.eq.s32.totalorder %s111, 0
      %s114 = sadd.s32 %s113, 1
      %s115 = scalar_select %p112, %s113, %s114
      %p118 = pneg %p112
      %p119 = scmp.eq.s32.totalorder %s16, 3
      %p120 = por %p118, %p119
      %p121 = scmp.ne.s32.totalorder %s113, %s116
      %p122 = scmp.eq.s32.totalorder %s16, 0
      %p123 = por %p121, %p122
      %p124 = scmp.ne.s32.totalorder %s113, %s116
      %p125 = scmp.eq.s32.totalorder %s21, 3
      %p126 = por %p124, %p125
      %p127 = scmp.ne.s32.totalorder %s116, %s117
      %p128 = scmp.eq.s32.totalorder %s21, 0
      %p129 = por %p127, %p128
      %p130 = scmp.ne.s32.totalorder %s116, %s117
      %p131 = scmp.eq.s32.totalorder %s22, 3
      %p132 = por %p130, %p131
      %p134 = scmp.ne.s32.totalorder %s117, %s133
      %p135 = scmp.eq.s32.totalorder %s22, 0
      %p136 = por %p134, %p135
      %p137 = scmp.le.s32.totalorder 1, %s16
      %p138 = scmp.lt.s32.totalorder %s16, 5
      %p139 = pnand %p137, %p138
      %p140 = pneg %p139
      // Predicated region
      $region9: #{tpu_custom_call.1} parent=5 // pred_check
        _
      $region10: #{tpu_custom_call.1} parent=5 // pred_check_branch
        %142 = sbr.rel (%p139) target = $region12
      $region11: #{tpu_custom_call.1} parent=5 // pred_region
        %s143 = ssub.s32 %s16, 1
        // Predicated region
        $region13: #{tpu_custom_call.1} parent=11 // pred_check
          %p144 = pneg %p103
        $region14: #{tpu_custom_call.1} parent=11 // pred_check_branch
          %146 = sbr.rel (%p144) target = $region16
        $region15: #{tpu_custom_call.1} parent=11 // pred_region
          %148 = vsyncadd [#allocation7], 0
          %s149 = sshll.u32 %s2, 4
          %s150 = int_to_ptr.hbm [resolvable:$true] %s149
          %s151 = sshll.u32 [#allocation8], 4
          %s152 = int_to_ptr.vmem [resolvable:$true] %s151
          %157 = dma.hbm_to_vmem [thread:$0]  %s150, 1024, %s152, [#allocation7], 64, 64, 4
        $region16: #{tpu_custom_call.1} parent=11 // pred_fallthru
          _
      $region12: #{tpu_custom_call.1} parent=5 // pred_fallthru
        _
      %p158 = scmp.lt.s32.totalorder %s16, 4
      // Predicated region
      $region17: #{tpu_custom_call.1} parent=5 // pred_check
        %p159 = pneg %p158
      $region18: #{tpu_custom_call.1} parent=5 // pred_check_branch
        %161 = sbr.rel (%p159) target = $region20
      $region19: #{tpu_custom_call.1} parent=5 // pred_region
        // Predicated region
        $region21: #{tpu_custom_call.1} parent=19 // pred_check
          %p162 = pneg %p50
        $region22: #{tpu_custom_call.1} parent=19 // pred_check_branch
          %164 = sbr.rel (%p162) target = $region24
        $region23: #{tpu_custom_call.1} parent=19 // pred_region
          %s165 = sand.u32 %s40, 1
          %s166 = scalar_lea.sflag [#allocation4], %s165
          %s167 = sand.u32 %s40, 1
          %s168 = smul.addr %s167, 2
          %s169 = scalar_lea.vmem [#allocation3], %s168
          %s170 = smul.u32 2, %s24
          %172 = vsyncadd %s166, 0
          %s173 = smul.addr %s23, 8
          %s174 = sadd.s32 %s170, %s173
          %s175 = scalar_lea.hbm %s0, %s174
          %s177 = sshll.u32 %s175, 4
          %s178 = int_to_ptr.hbm [resolvable:$true] %s177
          %s179 = sshll.u32 %s169, 4
          %s180 = int_to_ptr.vmem [resolvable:$true] %s179
          %182 = dma.hbm_to_vmem [thread:$0]  %s178, 32, %s180, %s166
        $region24: #{tpu_custom_call.1} parent=19 // pred_fallthru
          _
        // Predicated region
        $region25: #{tpu_custom_call.1} parent=19 // pred_check
          %p183 = pneg %p76
        $region26: #{tpu_custom_call.1} parent=19 // pred_check_branch
          %185 = sbr.rel (%p183) target = $region28
        $region27: #{tpu_custom_call.1} parent=19 // pred_region
          %s186 = sand.u32 %s16, 1
          %s187 = scalar_lea.sflag [#allocation7], %s186
          %s188 = sand.u32 %s66, 1
          %s189 = smul.addr %s188, 128
          %s190 = scalar_lea.vmem [#allocation6], %s189
          %s191 = smul.u32 32, %s24
          %193 = vsyncadd %s187, 0
          %s194 = smul.addr %s191, 4
          %s195 = scalar_lea.hbm %s1, %s194
          %s196 = sshll.u32 %s195, 4
          %s197 = int_to_ptr.hbm [resolvable:$true] %s196
          %s198 = sshll.u32 %s190, 4
          %s199 = int_to_ptr.vmem [resolvable:$true] %s198
          %204 = dma.hbm_to_vmem [thread:$0]  %s197, 2048, %s199, %s187, 64, 64, 4
        $region28: #{tpu_custom_call.1} parent=19 // pred_fallthru
          _
      $region20: #{tpu_custom_call.1} parent=5 // pred_fallthru
        _
      %p205 = scmp.le.s32.totalorder 1, %s16
      %p206 = scmp.lt.s32.totalorder %s16, 5
      %p207 = pnand %p205, %p206
      %p208 = pneg %p207
      // Predicated region
      $region29: #{tpu_custom_call.1} parent=5 // pred_check
        _
      $region30: #{tpu_custom_call.1} parent=5 // pred_check_branch
        %210 = sbr.rel (%p207) target = $region32
      $region31: #{tpu_custom_call.1} parent=5 // pred_region
        %s211 = ssub.s32 %s16, 1
        %s212 = sand.u32 %s43, 1
        %s213 = scalar_lea.sflag [#allocation4], %s212
        %s214 = sand.u32 %s43, 1
        %s215 = smul.addr %s214, 2
        %s216 = scalar_lea.vmem [#allocation3], %s215
        // Predicated region
        $region33: #{tpu_custom_call.1} parent=31 // pred_check
          %p217 = pneg %p56
        $region34: #{tpu_custom_call.1} parent=31 // pred_check_branch
          %219 = sbr.rel (%p217) target = $region36
        $region35: #{tpu_custom_call.1} parent=31 // pred_region
          %221 = dma.done %s213, 32
        $region36: #{tpu_custom_call.1} parent=31 // pred_fallthru
          _
        %s222 = sand.u32 %s21, 1
        %s223 = scalar_lea.sflag [#allocation7], %s222
        %s224 = sand.u32 %s69, 1
        %s225 = smul.addr %s224, 128
        %s226 = scalar_lea.vmem [#allocation6], %s225
        // Predicated region
        $region37: #{tpu_custom_call.1} parent=31 // pred_check
          %p227 = pneg %p82
        $region38: #{tpu_custom_call.1} parent=31 // pred_check_branch
          %229 = sbr.rel (%p227) target = $region40
        $region39: #{tpu_custom_call.1} parent=31 // pred_region
          %231 = dma.done %s223, 2048
        $region40: #{tpu_custom_call.1} parent=31 // pred_fallthru
          _
        // Predicated region
        $region41: #{tpu_custom_call.1} parent=31 // pred_check
          %p232 = pneg %p103
        $region42: #{tpu_custom_call.1} parent=31 // pred_check_branch
          %234 = sbr.rel (%p232) target = $region44
        $region43: #{tpu_custom_call.1} parent=31 // pred_region
          %236 = dma.done [#allocation7], 1024
        $region44: #{tpu_custom_call.1} parent=31 // pred_fallthru
          _
        %s237 = sand.u32 %s43, 1
        %s238 = scalar_lea.sflag [#allocation4], %s237
        %s239 = sand.u32 %s43, 1
        %s240 = smul.addr %s239, 2
        %s241 = scalar_lea.vmem [#allocation3], %s240
        %p242 = pneg %p56
        %p243 = pneg %p53
        %s244 = sand.u32 %s21, 1
        %s245 = scalar_lea.sflag [#allocation7], %s244
        %s246 = sand.u32 %s69, 1
        %s247 = smul.addr %s246, 128
        %s248 = scalar_lea.vmem [#allocation6], %s247
        %p249 = pneg %p82
        %p250 = pneg %p79
        %p251 = pneg %p103
        %p252 = pneg %p100
        %p253 = pneg %p129
        %p254 = pneg %p126
        %s255 = smul.u32 2, %s26
        %s256 = smul.u32 32, %s26
        %p257 = scmp.eq.s32.totalorder %s26, 0
        // Predicated region
        $region45: #{tpu_custom_call.1} parent=31 // pred_check
          %p258 = pneg %p257
        $region46: #{tpu_custom_call.1} parent=31 // pred_check_branch
          %260 = sbr.rel (%p258) target = $region48
        $region47: #{tpu_custom_call.1} parent=31 // pred_region
          %261 = vst [vmem:[#allocation2] sm:$0x3] 0.0
        $region48: #{tpu_custom_call.1} parent=31 // pred_fallthru
          _
        %v262 = vld [vmem:[#allocation2] sm:$0x3]
        %v263 = vld [vmem:[%s216] sm:$0x3]
        %v264 = vld [vmem:[%s226] sm:$0xf]
        %v265 = vld [vmem:[%s226 + $0x4] sm:$0xf]
        %v266 = vld [vmem:[%s226 + $0x8] sm:$0xf]
        %v267 = vld [vmem:[%s226 + $0xc] sm:$0xf]
        %v268 = vld [vmem:[%s226 + $0x10] sm:$0xf]
        %v269 = vld [vmem:[%s226 + $0x14] sm:$0xf]
        %v270 = vld [vmem:[%s226 + $0x18] sm:$0xf]
        %v271 = vld [vmem:[%s226 + $0x1c] sm:$0xf]
        %v272 = vld [vmem:[%s226 + $0x20] sm:$0xf]
        %v273 = vld [vmem:[%s226 + $0x24] sm:$0xf]
        %v274 = vld [vmem:[%s226 + $0x28] sm:$0xf]
        %v275 = vld [vmem:[%s226 + $0x2c] sm:$0xf]
        %v276 = vld [vmem:[%s226 + $0x30] sm:$0xf]
        %v277 = vld [vmem:[%s226 + $0x34] sm:$0xf]
        %v278 = vld [vmem:[%s226 + $0x38] sm:$0xf]
        %v279 = vld [vmem:[%s226 + $0x3c] sm:$0xf]
        %v280 = vld [vmem:[%s226 + $0x40] sm:$0xf]
        %v281 = vld [vmem:[%s226 + $0x44] sm:$0xf]
        %v282 = vld [vmem:[%s226 + $0x48] sm:$0xf]
        %v283 = vld [vmem:[%s226 + $0x4c] sm:$0xf]
        %v284 = vld [vmem:[%s226 + $0x50] sm:$0xf]
        %v285 = vld [vmem:[%s226 + $0x54] sm:$0xf]
        %v286 = vld [vmem:[%s226 + $0x58] sm:$0xf]
        %v287 = vld [vmem:[%s226 + $0x5c] sm:$0xf]
        %v288 = vld [vmem:[%s226 + $0x60] sm:$0xf]
        %v289 = vld [vmem:[%s226 + $0x64] sm:$0xf]
        %v290 = vld [vmem:[%s226 + $0x68] sm:$0xf]
        %v291 = vld [vmem:[%s226 + $0x6c] sm:$0xf]
        %v292 = vld [vmem:[%s226 + $0x70] sm:$0xf]
        %v293 = vld [vmem:[%s226 + $0x74] sm:$0xf]
        %v294 = vld [vmem:[%s226 + $0x78] sm:$0xf]
        %v295 = vld [vmem:[%s226 + $0x7c] sm:$0xf]
        %297 = vst [vmem:[#allocation1] ss:$9 sm:$0xff] %v263
        %v298 = vld [vmem:[#allocation1] sm:$0xff]
        %v299 = vld [vmem:[#allocation1 + $0x9] sm:$0xff]
        %v334 = vunpack.c.l.b16 %v264
        %v335 = vunpack.c.l.b16 %v265
        %v336 = vunpack.c.l.b16 %v266
        %v337 = vunpack.c.l.b16 %v267
        %v338 = vunpack.c.l.b16 %v268
        %v339 = vunpack.c.l.b16 %v269
        %v340 = vunpack.c.l.b16 %v270
        %v341 = vunpack.c.l.b16 %v271
        %v342 = vunpack.c.l.b16 %v272
        %v343 = vunpack.c.l.b16 %v273
        %v344 = vunpack.c.l.b16 %v274
        %v345 = vunpack.c.l.b16 %v275
        %v346 = vunpack.c.l.b16 %v276
        %v347 = vunpack.c.l.b16 %v277
        %v348 = vunpack.c.l.b16 %v278
        %v349 = vunpack.c.l.b16 %v279
        %v350 = vunpack.c.l.b16 %v280
        %v351 = vunpack.c.l.b16 %v281
        %v352 = vunpack.c.l.b16 %v282
        %v353 = vunpack.c.l.b16 %v283
        %v354 = vunpack.c.l.b16 %v284
        %v355 = vunpack.c.l.b16 %v285
        %v356 = vunpack.c.l.b16 %v286
        %v357 = vunpack.c.l.b16 %v287
        %v358 = vunpack.c.l.b16 %v288
        %v359 = vunpack.c.l.b16 %v289
        %v360 = vunpack.c.l.b16 %v290
        %v361 = vunpack.c.l.b16 %v291
        %v362 = vunpack.c.l.b16 %v292
        %v363 = vunpack.c.l.b16 %v293
        %v364 = vunpack.c.l.b16 %v294
        %v365 = vunpack.c.l.b16 %v295
        %v366 = vpack.c.b16 %v335, %v334
        %v367 = vpack.c.b16 %v337, %v336
        %v368 = vpack.c.b16 %v339, %v338
        %v369 = vpack.c.b16 %v341, %v340
        %v370 = vpack.c.b16 %v343, %v342
        %v371 = vpack.c.b16 %v345, %v344
        %v372 = vpack.c.b16 %v347, %v346
        %v373 = vpack.c.b16 %v349, %v348
        %v374 = vpack.c.b16 %v351, %v350
        %v375 = vpack.c.b16 %v353, %v352
        %v376 = vpack.c.b16 %v355, %v354
        %v377 = vpack.c.b16 %v357, %v356
        %v378 = vpack.c.b16 %v359, %v358
        %v379 = vpack.c.b16 %v361, %v360
        %v380 = vpack.c.b16 %v363, %v362
        %v381 = vpack.c.b16 %v365, %v364
        %398 = vmatpush.bf16.msra.mxu0 %v373
        %399 = vmatpush.bf16.msra.mxu0 %v372
        %400 = vmatpush.bf16.msra.mxu0 %v371
        %401 = vmatpush.bf16.msra.mxu0 %v370
        %402 = vmatpush.bf16.msra.mxu0 %v369
        %403 = vmatpush.bf16.msra.mxu0 %v368
        %404 = vmatpush.bf16.msra.mxu0 %v367
        %405 = vmatpush.bf16.msra.mxu0 %v366
        %406 = vmatmul.bf16.gmra.mxu0 %v298
        %v407 = vpop.f32.mrf.mxu0
        %v408 = vadd.f32 0.0, %v407
        %v409 = vpop.f32.mrf.mxu0
        %410 = vdwg.mxu0
        %411 = vmatpush.bf16.msra.mxu0 %v381
        %412 = vmatpush.bf16.msra.mxu0 %v380
        %413 = vmatpush.bf16.msra.mxu0 %v379
        %414 = vmatpush.bf16.msra.mxu0 %v378
        %415 = vmatpush.bf16.msra.mxu0 %v377
        %416 = vmatpush.bf16.msra.mxu0 %v376
        %417 = vmatpush.bf16.msra.mxu0 %v375
        %418 = vmatpush.bf16.msra.mxu0 %v374
        %419 = vmatmul.bf16.gmra.mxu0 %v299
        %v420 = vpop.f32.mrf.mxu0
        %v421 = vadd.f32 %v408, %v420
        %v422 = vpop.f32.mrf.mxu0
        %423 = vdwg.mxu0
        %v424 = vadd.f32 %v262, %v421
        %425 = vst [vmem:[#allocation2] sm:$0x3] %v424
        %p426 = scmp.eq.s32.totalorder %s26, 3
        // Predicated region
        $region49: #{tpu_custom_call.1} parent=31 // pred_check
          %p427 = pneg %p426
        $region50: #{tpu_custom_call.1} parent=31 // pred_check_branch
          %429 = sbr.rel (%p427) target = $region52
        $region51: #{tpu_custom_call.1} parent=31 // pred_region
          %v430 = vld [vmem:[#allocation2] sm:$0x3]
          %v431 = vmul.f32 %v430, %v430
          %vm432 = vcmask 1041408
          %v433 = vsel %vm432, %v431, 0.0
          %434 = vadd.xlane.f32.xlu0 %v433
          %v435 = vpop.xlane.xlu0 %434
          %v436 = vadd.f32 %v435, 1e-12
          %v437 = vrsqrt.pop %v436
          %v438 = vmul.f32 %v437, %v436
          %v439 = vmul.f32 %v438, %v437
          %v440 = vmul.f32 0.5, %v439
          %v441 = vsub.f32 1.5, %v440
          %v442 = vmul.f32 %v437, %v441
          %vm443 = vweird.f32 %v436
          %vm444 = vweird.f32 %v437
          %vm445 = vmor %vm443, %vm444
          %v446 = vsel %vm445, %v437, %v442
          %v447 = vmul.f32 %v430, %v446
          %v448 = vpack.c.bf16 %v447, %v447
          %v449 = vld [vmem:[#allocation8] sm:$0xf]
          %v450 = vld [vmem:[#allocation8 + $0x4] sm:$0xf]
          %v451 = vld [vmem:[#allocation8 + $0x8] sm:$0xf]
          %v452 = vld [vmem:[#allocation8 + $0xc] sm:$0xf]
          %v453 = vld [vmem:[#allocation8 + $0x10] sm:$0xf]
          %v454 = vld [vmem:[#allocation8 + $0x14] sm:$0xf]
          %v455 = vld [vmem:[#allocation8 + $0x18] sm:$0xf]
          %v456 = vld [vmem:[#allocation8 + $0x1c] sm:$0xf]
          %v457 = vld [vmem:[#allocation8 + $0x20] sm:$0xf]
          %v458 = vld [vmem:[#allocation8 + $0x24] sm:$0xf]
          %v459 = vld [vmem:[#allocation8 + $0x28] sm:$0xf]
          %v460 = vld [vmem:[#allocation8 + $0x2c] sm:$0xf]
          %v461 = vld [vmem:[#allocation8 + $0x30] sm:$0xf]
          %v462 = vld [vmem:[#allocation8 + $0x34] sm:$0xf]
          %v463 = vld [vmem:[#allocation8 + $0x38] sm:$0xf]
          %v464 = vld [vmem:[#allocation8 + $0x3c] sm:$0xf]
          %v465 = vlaneseq
          %v466 = vand.u32 %v465, 127
          %vm467 = vcmp.lt.s32.totalorder %v466, 16
          %v468 = vsel %vm467, 0.0, -1e+30
          %v485 = vunpack.c.l.b16 %v449
          %v486 = vunpack.c.l.b16 %v450
          %v487 = vunpack.c.l.b16 %v451
          %v488 = vunpack.c.l.b16 %v452
          %v489 = vunpack.c.l.b16 %v453
          %v490 = vunpack.c.l.b16 %v454
          %v491 = vunpack.c.l.b16 %v455
          %v492 = vunpack.c.l.b16 %v456
          %v493 = vunpack.c.l.b16 %v457
          %v494 = vunpack.c.l.b16 %v458
          %v495 = vunpack.c.l.b16 %v459
          %v496 = vunpack.c.l.b16 %v460
          %v497 = vunpack.c.l.b16 %v461
          %v498 = vunpack.c.l.b16 %v462
          %v499 = vunpack.c.l.b16 %v463
          %v500 = vunpack.c.l.b16 %v464
          %v501 = vpack.c.b16 %v486, %v485
          %v502 = vpack.c.b16 %v488, %v487
          %v503 = vpack.c.b16 %v490, %v489
          %v504 = vpack.c.b16 %v492, %v491
          %v505 = vpack.c.b16 %v494, %v493
          %v506 = vpack.c.b16 %v496, %v495
          %v507 = vpack.c.b16 %v498, %v497
          %v508 = vpack.c.b16 %v500, %v499
          %517 = vmatpush.bf16.msra.mxu0 %v508
          %518 = vmatpush.bf16.msra.mxu0 %v507
          %519 = vmatpush.bf16.msra.mxu0 %v506
          %520 = vmatpush.bf16.msra.mxu0 %v505
          %521 = vmatpush.bf16.msra.mxu0 %v504
          %522 = vmatpush.bf16.msra.mxu0 %v503
          %523 = vmatpush.bf16.msra.mxu0 %v502
          %524 = vmatpush.bf16.msra.mxu0 %v501
          %525 = vmatmul.bf16.gmra.mxu0 %v448
          %v526 = vpop.f32.mrf.mxu0
          %v527 = vadd.f32 %v468, %v526
          %v528 = vpop.f32.mrf.mxu0
          %529 = vdwg.mxu0
          %v530 = vsel %vm432, %v527, -inf
          %531 = vmax.xlane.f32.xlu0 %v530
          %v532 = vpop.xlane.xlu0 %531
          %v533 = vsub.f32 %v527, %v532
          %v534 = vmul.f32 %v533, 1.442695
          %v535 = vpow.pop %v534
          %v536 = vsel %vm432, %v535, 0.0
          %537 = vadd.xlane.f32.xlu0 %v536
          %v538 = vpop.xlane.xlu0 %537
          %v539 = vrcp.pop %v538
          %v540 = vmul.f32 %v535, %v539
          %v541 = vsel %vm432, %v540, 0.0
          %v542 = vrot.slane %v541, 4
          %v543 = vadd.f32 %v541, %v542
          %v544 = vrot.slane %v543, 2
          %v545 = vadd.f32 %v543, %v544
          %v546 = vrot.slane %v545, 1
          %v547 = vadd.f32 %v545, %v546
          %v548 = vrcp.pop 2.0
          %v549 = vmul.f32 2.0, %v548
          %v550 = vsub.f32 1.0, %v549
          %v551 = vmul.f32 %v548, %v550
          %v552 = vadd.f32 %v548, %v551
          %vm553 = vweird.f32 %v548
          %v554 = vsel %vm553, %v548, %v552
          %v555 = vmul.f32 %v547, %v554
          %556 = vst [vmem:[#allocation9] sm:$0x1] %v555
        $region52: #{tpu_custom_call.1} parent=31 // pred_fallthru
          _
        // Predicated region
        $region53: #{tpu_custom_call.1} parent=31 // pred_check
          %p557 = pneg %p126
        $region54: #{tpu_custom_call.1} parent=31 // pred_check_branch
          %559 = sbr.rel (%p557) target = $region56
        $region55: #{tpu_custom_call.1} parent=31 // pred_region
          %561 = vsyncadd [#allocation5], 0
          %s562 = scalar_lea.hbm %s3, %s25
          %s564 = sshll.u32 [#allocation9], 4
          %s565 = int_to_ptr.vmem [resolvable:$true] %s564
          %s566 = sshll.u32 %s562, 4
          %s567 = int_to_ptr.hbm [resolvable:$true] %s566
          %569 = dma.vmem_to_hbm [thread:$0]  %s565, 16, %s567, [#allocation5]
        $region56: #{tpu_custom_call.1} parent=31 // pred_fallthru
          _
        // Predicated region
        $region57: #{tpu_custom_call.1} parent=31 // pred_check
          %p570 = pneg %p126
        $region58: #{tpu_custom_call.1} parent=31 // pred_check_branch
          %572 = sbr.rel (%p570) target = $region60
        $region59: #{tpu_custom_call.1} parent=31 // pred_region
          %574 = dma.done [#allocation5], 16
        $region60: #{tpu_custom_call.1} parent=31 // pred_fallthru
          _
      $region32: #{tpu_custom_call.1} parent=5 // pred_fallthru
        _
      %p575 = scmp.le.s32.totalorder 2, %s16
      // Predicated region
      $region61: #{tpu_custom_call.1} parent=5 // pred_check
        %p576 = pneg %p575
      $region62: #{tpu_custom_call.1} parent=5 // pred_check_branch
        %578 = sbr.rel (%p576) target = $region64
      $region63: #{tpu_custom_call.1} parent=5 // pred_region
        %s579 = ssub.s32 %s16, 2
      $region64: #{tpu_custom_call.1} parent=5 // pred_fallthru
        _
    $region6: #{tpu_custom_call.1} parent=1 // loop_footer
      %s20 = sadd.s32 1, %s16
    $region7: #{tpu_custom_call.1} parent=1 // loop_footer_branch
      %15 = sbr.rel target = $region3
    $region8: #{tpu_custom_call.1} parent=1 // loop_exit
      _
    %580 = vsyncpa [#allocation4], 1
    %s581 = scalar_lea.sflag [#allocation4], 1
    %582 = vsyncpa %s581, 1
    %583 = vsyncpa [#allocation7], 1
    %s584 = scalar_lea.sflag [#allocation7], 1
    %585 = vsyncpa %s584, 1
    %586 = vsyncpa [#allocation5], 1
    %s587 = scalar_lea.sflag [#allocation5], 1
    %588 = vsyncpa %s587, 1

</llo_original>
